<compile_context>
chip_gen: v6e
topology: v6e:2x2x1
jax: 0.10.0
libtpu: 0.0.40
codegen_flags: <defaults>
</compile_context>

<pallas_src>
import functools

import jax
import jax.numpy as jnp
from jax.experimental import pallas as pl
from jax.experimental.pallas import tpu as pltpu

_LANE_TILE = 2048                 # L-tile (multiple of 128) for the tiled path
_ROW_TILE = 256                   # row (N*C) tile for the tiled path
_HALO = 128                       # lane width of the neighbour halo blocks
_VMEM_LIMIT = 32 * 1024 * 1024    # scoped-VMEM request (safe on v5e/v6e/v7x)


def _neg_fill(dtype):
    """Identity element for max() in the given dtype."""
    if jnp.issubdtype(dtype, jnp.floating):
        return float("-inf")
    return int(jnp.iinfo(dtype).min)


def _round_up(v, m):
    return ((v + m - 1) // m) * m


def _maxpool_kernel_single(x_ref, o_ref, *, kernel_size, pad):
    """Whole row in one lane-dense block: (TR, L) -> (TR, L).

    SAME padding is fused by clipping the tap range at the row ends, so no
    padded copy of x is ever materialised (in HBM or VMEM) and the bulk of the
    output is a mask-free K-tap max read directly from x_ref.
    """
    length = x_ref.shape[1]
    pad_r = kernel_size - 1 - pad
    body_w = length - kernel_size + 1      # columns whose window is fully in-range

    if body_w > 0:
        acc = x_ref[:, 0:body_w]
        for k in range(1, kernel_size):
            acc = jnp.maximum(acc, x_ref[:, k:k + body_w])
        o_ref[:, pad:pad + body_w] = acc

    # The K-1 edge columns (or every column when L < K) with clamped windows.
    for t in range(length):
        if body_w > 0 and pad <= t < pad + body_w:
            continue
        lo = max(0, t - pad)
        hi = min(length, t + pad_r + 1)
        v = x_ref[:, lo:lo + 1]
        for s in range(lo + 1, hi):
            v = jnp.maximum(v, x_ref[:, s:s + 1])
        o_ref[:, t:t + 1] = v


def _maxpool_kernel_tiled(xl_ref, xc_ref, xr_ref, o_ref, win_ref, *,
                          kernel_size, pad, lane_tile, halo, num_l, last_rem):
    """Tiled-L path.

    xc is the current (TR, TL) tile; xl / xr are 128-lane halo blocks of the
    neighbouring tiles (block indices clamped at the array edges).  They are
    stitched into the (TR, TL + 2*HALO) window scratch with three aligned
    stores; SAME padding and ragged-end handling only touch the edge tiles via
    pl.when, so interior tiles run a completely mask-free K-tap max of sliced
    ref loads.
    """
    j = pl.program_id(1)
    tl = lane_tile
    rows = o_ref.shape[0]
    pad_r = kernel_size - 1 - pad
    neg = _neg_fill(win_ref.dtype)

    # [prev-halo | current | next-halo] with three aligned stores.
    win_ref[:, 0:halo] = xl_ref[...]
    win_ref[:, halo:halo + tl] = xc_ref[...]
    win_ref[:, halo + tl:halo + tl + halo] = xr_ref[...]

    @pl.when(j == 0)
    def _():  # global positions < 0
        win_ref[:, 0:halo] = jnp.full((rows, halo), neg, dtype=win_ref.dtype)

    @pl.when(j == num_l - 1)
    def _():  # global positions >= L (ragged centre remainder + right halo)
        win_ref[:, halo + last_rem:halo + tl + halo] = jnp.full(
            (rows, tl + halo - last_rem), neg, dtype=win_ref.dtype)

    if last_rem < pad_r:
        # A very short last tile: the previous tile can also reach past the end
        # of the row through its right halo.
        @pl.when(j == num_l - 2)
        def _():
            win_ref[:, halo + tl + last_rem:halo + tl + halo] = jnp.full(
                (rows, halo - last_rem), neg, dtype=win_ref.dtype)

    # Mask-free VPU max over the K shifted taps (sliced loads from the scratch).
    # TODO(synk): for K >= ~16 switch to the van Herk / Gil-Werman running max.
    base = halo - pad
    acc = win_ref[:, base:base + tl]
    for k in range(1, kernel_size):
        acc = jnp.maximum(acc, win_ref[:, base + k:base + k + tl])
    o_ref[...] = acc


def _choose_single_row_tile(r, length, itemsize, *, target_bytes=2 << 20,
                            budget_bytes=12 << 20):
    """Row tile for the single-length-tile path: each grid step should move
    >= ~target_bytes of HBM traffic while the double-buffered in/out blocks stay
    well inside the scoped-VMEM budget (sized for v7x)."""
    lanes = _round_up(max(length, 1), 128)          # vreg lane padding
    row_bytes = lanes * itemsize
    cap = max(8, budget_bytes // (4 * row_bytes))   # 2x double-buffer * (in+out)
    tr = max(8, min(target_bytes // row_bytes, cap, 4096))
    tr = max(8, (tr // 8) * 8)
    if r <= tr:
        return r
    nblk = pl.cdiv(r, tr)                            # balance: no tiny last block
    return min(tr, _round_up(pl.cdiv(r, nblk), 8))


def maxpool1d_same(x, kernel_size, *, lane_tile=_LANE_TILE, row_tile=_ROW_TILE):
    """x: (N, C, L) -> (N, C, L), matching MaxPool1d_SAME(kernel_size).forward."""
    if kernel_size < 1:
        raise ValueError("kernel_size must be >= 1")
    n, c, length = x.shape
    pad = kernel_size // 2
    pad_r = kernel_size - 1 - pad

    r = n * c
    x2d = x.reshape(r, length)                       # free: contiguous reshape
    itemsize = jnp.dtype(x.dtype).itemsize

    if length <= lane_tile:
        # ---- single lane-dense tile over the whole length axis --------------
        # TODO(synk): for L << 128 the lane axis is mostly padding; folding
        # groups of rows into the lane axis would recover that bandwidth.
        tr = _choose_single_row_tile(r, length, itemsize)
        num_r = pl.cdiv(r, tr)
        if num_r == 1 and r >= 16:
            # Keep >= 2 parallel blocks so a 2-TensorCore chip (v7x) stays busy.
            tr = _round_up(pl.cdiv(r, 2), 8)
            num_r = pl.cdiv(r, tr)

        cost = pl.CostEstimate(
            flops=int(r * length * max(kernel_size - 1, 1)),
            transcendentals=0,
            bytes_accessed=int(2 * r * length * itemsize))
        kernel = functools.partial(_maxpool_kernel_single,
                                   kernel_size=kernel_size, pad=pad)
        out = pl.pallas_call(
            kernel,
            out_shape=jax.ShapeDtypeStruct((r, length), x.dtype),
            grid_spec=pltpu.PrefetchScalarGridSpec(
                num_scalar_prefetch=0,
                grid=(num_r,),
                in_specs=[pl.BlockSpec((tr, length), lambda i: (i, 0))],
                out_specs=pl.BlockSpec((tr, length), lambda i: (i, 0)),
            ),
            compiler_params=pltpu.CompilerParams(
                dimension_semantics=("parallel",),
                vmem_limit_bytes=_VMEM_LIMIT),
            cost_estimate=cost,
        )(x2d)
    else:
        # ---- tiled length axis with 128-lane halo blocks ---------------------
        halo = _HALO
        if pad > halo or pad_r > halo:
            # TODO(synk): kernel_size > 257 on long rows needs a wider halo (or
            # the van Herk / Gil-Werman running-max formulation).
            raise NotImplementedError(
                "maxpool1d_same: kernel_size too large for the tiled path")
        tl = lane_tile
        assert tl % halo == 0 and tl % 128 == 0
        tl_hblocks = tl // halo
        num_l = pl.cdiv(length, tl)                   # >= 2 here
        n_hblocks = pl.cdiv(length, halo)
        last_rem = length - (num_l - 1) * tl          # columns in the last tile

        if r <= row_tile:
            tr = r
        else:
            tr = min(row_tile,
                     _round_up(pl.cdiv(r, pl.cdiv(r, row_tile)), 8))
        num_r = pl.cdiv(r, tr)

        cost = pl.CostEstimate(
            flops=int(r * length * max(kernel_size - 1, 1)),
            transcendentals=0,
            # reads include the ~2*halo/tl halo re-read amplification
            bytes_accessed=int(r * length * itemsize * (2 * tl + 2 * halo) // tl))
        kernel = functools.partial(
            _maxpool_kernel_tiled, kernel_size=kernel_size, pad=pad,
            lane_tile=tl, halo=halo, num_l=num_l, last_rem=last_rem)
        out = pl.pallas_call(
            kernel,
            out_shape=jax.ShapeDtypeStruct((r, length), x.dtype),
            grid_spec=pltpu.PrefetchScalarGridSpec(
                num_scalar_prefetch=0,
                grid=(num_r, num_l),
                in_specs=[
                    # last 128 lanes of the previous tile (clamped at j == 0;
                    # duplicated data is overwritten with -inf in the kernel)
                    pl.BlockSpec(
                        (tr, halo),
                        lambda i, j: (i, jnp.maximum(j * tl_hblocks - 1, 0))),
                    # current lane tile
                    pl.BlockSpec((tr, tl), lambda i, j: (i, j)),
                    # first 128 lanes of the next tile (clamped at the end;
                    # invalid columns are overwritten with -inf in the kernel)
                    pl.BlockSpec(
                        (tr, halo),
                        lambda i, j: (i, jnp.minimum((j + 1) * tl_hblocks,
                                                     n_hblocks - 1))),
                ],
                out_specs=pl.BlockSpec((tr, tl), lambda i, j: (i, j)),
                scratch_shapes=[pltpu.VMEM((tr, tl + 2 * halo), x.dtype)],
            ),
            compiler_params=pltpu.CompilerParams(
                dimension_semantics=("parallel", "parallel"),
                vmem_limit_bytes=_VMEM_LIMIT),
            cost_estimate=cost,
        )(x2d, x2d, x2d)

    return out.reshape(n, c, length)


def _reference_maxpool1d_same(x, kernel_size):
    """Pure-JAX reference matching the PyTorch MaxPool1d_SAME module."""
    pad = kernel_size // 2
    length = x.shape[-1]
    xp = jnp.pad(x, ((0, 0), (0, 0), (pad, pad)), constant_values=-jnp.inf)
    taps = [xp[:, :, k:k + length] for k in range(kernel_size)]
    return jnp.max(jnp.stack(taps, axis=0), axis=0)


if __name__ == "__main__":
    key = jax.random.PRNGKey(0)
    batch, channels = 2, 4

    # (kernel_size, length): odd & even kernels; short lengths exercise the
    # single-tile path, long / ragged lengths exercise the tiled halo path
    # (partial last lane tile, partial last halo block, rem < pad_r fixup).
    cases = [(3, 16), (4, 16), (3, 300), (4, 5000), (3, 5000), (5, 4097)]
    for kernel_size, length in cases:
        key, k_x = jax.random.split(key)
        x = jax.random.normal(k_x, (batch, channels, length), dtype=jnp.float32)

        out = jax.block_until_ready(maxpool1d_same(x, kernel_size))
        ref = _reference_maxpool1d_same(x, kernel_size)

        assert out.shape == x.shape, (out.shape, kernel_size, length)
        assert jnp.array_equal(out, ref), (
            f"mismatch for kernel_size={kernel_size}, length={length}")

    # Ragged row blocks (r not a multiple of the row tile) through the tiled path.
    key, k_x = jax.random.split(key)
    x = jax.random.normal(k_x, (3, 7, 2500), dtype=jnp.float32)
    out = jax.block_until_ready(maxpool1d_same(x, 4, row_tile=8))
    assert jnp.array_equal(out, _reference_maxpool1d_same(x, 4))

    print("KERNEL_OK")
</pallas_src>

<mosaic_0001>
module attributes {stable_mosaic.version = 11 : i64} {
  func.func @_maxpool_kernel_single(%arg0: i32, %arg1: memref<8x16xf32, #tpu.memory_space<vmem>>, %arg2: memref<8x16xf32, #tpu.memory_space<vmem>>) attributes {dimension_semantics = [#tpu.dimension_semantics<parallel>], iteration_bounds = array<i64: 1>, scalar_prefetch = 0 : i64, scratch_operands = 0 : i64, tpu.core_type = #tpu.core_type<tc>, window_params = [{transform_indices = @transform_0, window_bounds = array<i64: 8, 16>}, {transform_indices = @transform_1, window_bounds = array<i64: 8, 16>}]} {
    %c0 = arith.constant 0 : index
    %c0_0 = arith.constant 0 : index
    %0 = vector.load %arg1[%c0, %c0_0] : memref<8x16xf32, #tpu.memory_space<vmem>>, vector<8x14xf32>
    %c0_1 = arith.constant 0 : index
    %c1 = arith.constant 1 : index
    %1 = vector.load %arg1[%c0_1, %c1] : memref<8x16xf32, #tpu.memory_space<vmem>>, vector<8x14xf32>
    %2 = arith.maximumf %0, %1 : vector<8x14xf32>
    %c0_2 = arith.constant 0 : index
    %c2 = arith.constant 2 : index
    %3 = vector.load %arg1[%c0_2, %c2] : memref<8x16xf32, #tpu.memory_space<vmem>>, vector<8x14xf32>
    %4 = arith.maximumf %2, %3 : vector<8x14xf32>
    %c0_3 = arith.constant 0 : index
    %c1_4 = arith.constant 1 : index
    %5 = vector.load %arg2[%c0_3, %c1_4] : memref<8x16xf32, #tpu.memory_space<vmem>>, vector<8x14xf32>
    tpu.vector_store %arg2[%c0_3, %c1_4], %4 {strides = array<i32>} : memref<8x16xf32, #tpu.memory_space<vmem>>, vector<8x14xf32>,
    %c0_5 = arith.constant 0 : index
    %c0_6 = arith.constant 0 : index
    %6 = vector.load %arg1[%c0_5, %c0_6] : memref<8x16xf32, #tpu.memory_space<vmem>>, vector<8x1xf32>
    %c0_7 = arith.constant 0 : index
    %c1_8 = arith.constant 1 : index
    %7 = vector.load %arg1[%c0_7, %c1_8] : memref<8x16xf32, #tpu.memory_space<vmem>>, vector<8x1xf32>
    %8 = arith.maximumf %6, %7 : vector<8x1xf32>
    %c0_9 = arith.constant 0 : index
    %c0_10 = arith.constant 0 : index
    %9 = vector.load %arg2[%c0_9, %c0_10] : memref<8x16xf32, #tpu.memory_space<vmem>>, vector<8x1xf32>
    tpu.vector_store %arg2[%c0_9, %c0_10], %8 {strides = array<i32>} : memref<8x16xf32, #tpu.memory_space<vmem>>, vector<8x1xf32>,
    %c0_11 = arith.constant 0 : index
    %c14 = arith.constant 14 : index
    %10 = vector.load %arg1[%c0_11, %c14] : memref<8x16xf32, #tpu.memory_space<vmem>>, vector<8x1xf32>
    %c0_12 = arith.constant 0 : index
    %c15 = arith.constant 15 : index
    %11 = vector.load %arg1[%c0_12, %c15] : memref<8x16xf32, #tpu.memory_space<vmem>>, vector<8x1xf32>
    %12 = arith.maximumf %10, %11 : vector<8x1xf32>
    %c0_13 = arith.constant 0 : index
    %c15_14 = arith.constant 15 : index
    %13 = vector.load %arg2[%c0_13, %c15_14] : memref<8x16xf32, #tpu.memory_space<vmem>>, vector<8x1xf32>
    tpu.vector_store %arg2[%c0_13, %c15_14], %12 {strides = array<i32>} : memref<8x16xf32, #tpu.memory_space<vmem>>, vector<8x1xf32>,
    return
  }
  func.func @transform_0(%arg0: i32) -> (i32, i32) {
    %c0_i32 = arith.constant 0 : i32
    %c0_i32_0 = arith.constant 0 : i32
    return %arg0, %c0_i32 : i32, i32
  }
  func.func @transform_1(%arg0: i32) -> (i32, i32) {
    %c0_i32 = arith.constant 0 : i32
    %c0_i32_0 = arith.constant 0 : i32
    return %arg0, %c0_i32 : i32, i32
  }
}

</mosaic_0001>

<llo_original>
// kernel: tpu_custom_call.1
$region0: #{tpu_custom_call.1}
  #allocation0 [shape = 'u32[]', space=smem, size = 0x4, offset = 0x4, fixed_abs, tag = 'smem constant byte address 0x4 - core index']
  #allocation1 [shape = 'u32[144,128]{1,0:T(1,128)}', space=vmem, size = 0x12000, scoped, tag = 'internal scratch']
  %s0 = inlined_call_operand.hbm [shape: f32[8,16], index: 0, kind: input, shape index: {}]
  %s1 = inlined_call_operand.hbm [shape: f32[8,16], index: 1, kind: output, shape index: {}]
  %s2 = sld [smem:[#allocation0]]
  $region18: #{tpu_custom_call.1} parent=0
    _
  %s4 = ssub.s32 1, %s2
  %s5 = scalar_select 0, %s4, %s2
  $region1: #{tpu_custom_call.1} parent=0
    #allocation2 [shape = 'u8[4096]{0}', space=vmem, size = 0x1000, scoped, tag = 'input window, operand 0, single buffered']
    #allocation3 [shape = 's32[1]{0}', space=sflag, size = 0x4, scoped, tag = 'scoped memory for tpu_custom_call.1']
    #allocation4 [shape = 's32[1]{0}', space=sflag, size = 0x4, scoped, tag = 'scoped memory for tpu_custom_call.1']
    #allocation5 [shape = 'u8[4096]{0}', space=vmem, size = 0x1000, scoped, tag = 'output window, operand 0, single buffered']
    %6 = vsyncpa [#allocation3], 0
    %7 = vsyncpa [#allocation4], 0
    // Predicated region
    $region2: #{tpu_custom_call.1} parent=1 // pred_check
      _
    $region3: #{tpu_custom_call.1} parent=1 // pred_check_branch
      %9 = sbr.rel (0) target = $region5
    $region4: #{tpu_custom_call.1} parent=1 // pred_region
      %s11 = ssub.s32 128, 128
      %12 = vsyncadd [#allocation3], %s11
      %s14 = sshll.u32 [#allocation2], 4
      %s15 = int_to_ptr.vmem [resolvable:$true] %s14
      %17 = dma.hbm_to_vmem [thread:$0]  %s0, 128, %s15, [#allocation3]
    $region5: #{tpu_custom_call.1} parent=1 // pred_fallthru
      _
    // Predicated region
    $region6: #{tpu_custom_call.1} parent=1 // pred_check
      _
    $region7: #{tpu_custom_call.1} parent=1 // pred_check_branch
      %19 = sbr.rel (0) target = $region9
    $region8: #{tpu_custom_call.1} parent=1 // pred_region
      %20 = dma.done [#allocation3], 128
    $region9: #{tpu_custom_call.1} parent=1 // pred_fallthru
      _
    %v21 = vld [vmem:[#allocation2] sm:$0xff]
    %23 = vrot.lane.b32.xlu0 %v21, 127
    %v24 = vpop.permute.xlu0 %23
    %v26 = vmax.f32 %v21, %v24
    %27 = vrot.lane.b32.xlu0 %v21, 126
    %v28 = vpop.permute.xlu0 %27
    %v30 = vmax.f32 %v26, %v28
    %32 = vrot.lane.b32.xlu0 %v30, 1
    %v33 = vpop.permute.xlu0 %32
    %vm35 = vcmask 121864
    %36 = vst.msk [vmem:[#allocation5] sm:$0xff] %vm35, %v33
    %v37 = vld [vmem:[#allocation2] sm:$0xff]
    %39 = vrot.lane.b32.xlu0 %v37, 127
    %v40 = vpop.permute.xlu0 %39
    %v42 = vmax.f32 %v37, %v40
    %vm43 = vcmask 7168
    %44 = vst.msk [vmem:[#allocation5] sm:$0xff] %vm43, %v42
    %v45 = vld [vmem:[#allocation2] sm:$0xff]
    %47 = vrot.lane.b32.xlu0 %v45, 127
    %v48 = vpop.permute.xlu0 %47
    %v50 = vmax.f32 %v45, %v48
    %52 = vrot.lane.b32.xlu0 %v50, 1
    %v53 = vpop.permute.xlu0 %52
    %vm55 = vcmask 130168
    %56 = vst.msk [vmem:[#allocation5] sm:$0xff] %vm55, %v53
    // Predicated region
    $region10: #{tpu_custom_call.1} parent=1 // pred_check
      _
    $region11: #{tpu_custom_call.1} parent=1 // pred_check_branch
      %58 = sbr.rel (0) target = $region13
    $region12: #{tpu_custom_call.1} parent=1 // pred_region
      %s60 = ssub.s32 128, 128
      %61 = vsyncadd [#allocation4], %s60
      %s63 = sshll.u32 [#allocation5], 4
      %s64 = int_to_ptr.vmem [resolvable:$true] %s63
      %66 = dma.vmem_to_hbm [thread:$0]  %s64, 128, %s1, [#allocation4]
    $region13: #{tpu_custom_call.1} parent=1 // pred_fallthru
      _
    // Predicated region
    $region14: #{tpu_custom_call.1} parent=1 // pred_check
      _
    $region15: #{tpu_custom_call.1} parent=1 // pred_check_branch
      %68 = sbr.rel (0) target = $region17
    $region16: #{tpu_custom_call.1} parent=1 // pred_region
      %69 = dma.done [#allocation4], 128
    $region17: #{tpu_custom_call.1} parent=1 // pred_fallthru
      _
    %70 = vsyncpa [#allocation3], 1
    %71 = vsyncpa [#allocation4], 1

</llo_original>
